<compile_context>
chip_gen: v7x
topology: tpu7x:2x2x1
jax: 0.10.0
libtpu: 0.0.40
codegen_flags: <defaults>
</compile_context>

<pallas_src>
import jax
import jax.numpy as jnp
from jax.experimental import pallas as pl
from jax.experimental.pallas import tpu as pltpu


def _round_up(x, m):
    return ((x + m - 1) // m) * m


def nac_kernel(x_ref, w_hat_ref, m_hat_ref, o_ref, w_scratch):
    # grid = (j over in_size tiles [parallel], i over batch tiles [arbitrary]).
    # The weight tile only depends on j, so compute it once (at i == 0) into
    # VMEM scratch and reuse it for all batch tiles of this j.
    i = pl.program_id(1)

    @pl.when(i == 0)
    def _():
        # W = tanh(W_hat) * sigmoid(M_hat): transcendental (EUP) + VPU work,
        # hoisted out of the steady-state batch loop.
        w_scratch[...] = jnp.tanh(w_hat_ref[...]) * jax.nn.sigmoid(m_hat_ref[...])

    # Steady state: pure MXU matmul against the resident weight tile.
    o_ref[...] = jnp.dot(
        x_ref[...], w_scratch[...], preferred_element_type=jnp.float32
    ).astype(o_ref.dtype)


def nac_forward(x, w_hat, m_hat, *, tm_max=256, tn_max=512):
    """out = x @ (tanh(w_hat) * sigmoid(m_hat)), tiled Pallas TPU kernel."""
    batch, out_size = x.shape
    out_size_w, in_size = w_hat.shape
    assert out_size == out_size_w, "x last dim must equal W_hat's first dim"
    assert m_hat.shape == w_hat.shape

    # Tile sizes: batch (sublane) tiles multiple of 8, in_size (lane) tiles
    # multiple of 128 so output stores are lane-dense (unmasked vst).
    tm = min(tm_max, _round_up(batch, 8))
    tn = min(tn_max, _round_up(in_size, 128))

    batch_p = _round_up(batch, tm)
    in_p = _round_up(in_size, tn)

    # Pad ragged dims; padded rows/cols are sliced off the result.
    if batch_p != batch:
        x = jnp.pad(x, ((0, batch_p - batch), (0, 0)))
    if in_p != in_size:
        pad = ((0, 0), (0, in_p - in_size))
        w_hat = jnp.pad(w_hat, pad)
        m_hat = jnp.pad(m_hat, pad)

    nj = in_p // tn
    ni = batch_p // tm

    out = pl.pallas_call(
        nac_kernel,
        out_shape=jax.ShapeDtypeStruct((batch_p, in_p), x.dtype),
        grid_spec=pltpu.PrefetchScalarGridSpec(
            num_scalar_prefetch=0,
            grid=(nj, ni),
            in_specs=[
                # x tile: (tm, K) -- K kept whole (NAC's output_size is small).
                pl.BlockSpec((tm, out_size), lambda j, i: (i, 0)),
                # W_hat / M_hat tiles: (K, tn), constant across the batch axis
                # so Pallas does not re-DMA them per batch tile.
                pl.BlockSpec((out_size, tn), lambda j, i: (0, j)),
                pl.BlockSpec((out_size, tn), lambda j, i: (0, j)),
            ],
            out_specs=pl.BlockSpec((tm, tn), lambda j, i: (i, j)),
            scratch_shapes=[pltpu.VMEM((out_size, tn), jnp.float32)],
        ),
        compiler_params=pltpu.CompilerParams(
            # j (in_size tiles) parallel -> shardable across v7x's 2 TCs;
            # i (batch tiles) must stay sequential: the weight scratch written
            # at i == 0 is reused across all batch tiles of this j.
            dimension_semantics=("parallel", "arbitrary"),
        ),
    )(x, w_hat, m_hat)

    if batch_p != batch or in_p != in_size:
        out = out[:batch, :in_size]
    return out


if __name__ == "__main__":
    # Small shapes consistent with the module: NAC(input_size, output_size)
    # with torch.matmul(input, W), W (output_size, input_size)
    #   => input (batch, output_size), out (batch, input_size).
    # Intentionally ragged + small tile caps to exercise multi-tile grid,
    # the weight-scratch reuse across batch tiles, and the padding path.
    batch = 20
    output_size = 16
    input_size = 200

    key = jax.random.PRNGKey(0)
    k_x, k_w, k_m = jax.random.split(key, 3)

    x = jax.random.normal(k_x, (batch, output_size), dtype=jnp.float32)
    w_hat = jax.random.normal(k_w, (output_size, input_size), dtype=jnp.float32)
    m_hat = jax.random.normal(k_m, (output_size, input_size), dtype=jnp.float32)

    out = nac_forward(x, w_hat, m_hat, tm_max=8, tn_max=128)  # grid = (2, 3)
    out = jax.block_until_ready(out)

    # Also exercise the default (single-tile-per-axis) fast path.
    out_big = jax.block_until_ready(nac_forward(x, w_hat, m_hat))

    # Pure-JAX reference for correctness.
    w_ref = jnp.tanh(w_hat) * jax.nn.sigmoid(m_hat)
    ref = x @ w_ref
    assert out.shape == (batch, input_size)
    assert jnp.allclose(out, ref, atol=1e-4, rtol=1e-4), "mismatch vs reference"
    assert jnp.allclose(out_big, ref, atol=1e-4, rtol=1e-4), "mismatch (default tiles)"

    print("KERNEL_OK")
</pallas_src>

<mosaic_0001>
module attributes {stable_mosaic.version = 11 : i64} {
  func.func @nac_kernel(%arg0: i32, %arg1: i32, %arg2: memref<8x16xf32, #tpu.memory_space<vmem>>, %arg3: memref<16x128xf32, #tpu.memory_space<vmem>>, %arg4: memref<16x128xf32, #tpu.memory_space<vmem>>, %arg5: memref<8x128xf32, #tpu.memory_space<vmem>>, %arg6: memref<16x128xf32, #tpu.memory_space<vmem>>) attributes {dimension_semantics = [#tpu.dimension_semantics<parallel>, #tpu.dimension_semantics<arbitrary>], iteration_bounds = array<i64: 2, 3>, scalar_prefetch = 0 : i64, scratch_operands = 1 : i64, tpu.core_type = #tpu.core_type<tc>, window_params = [{transform_indices = @transform_0, window_bounds = array<i64: 8, 16>}, {transform_indices = @transform_1, window_bounds = array<i64: 16, 128>}, {transform_indices = @transform_2, window_bounds = array<i64: 16, 128>}, {transform_indices = @transform_3, window_bounds = array<i64: 8, 128>}]} {
    %c0_i32 = arith.constant 0 : i32
    %0 = arith.cmpi eq, %arg1, %c0_i32 : i32
    %1 = arith.extui %0 : i1 to i32
    %c0_i32_0 = arith.constant 0 : i32
    %2 = arith.cmpi ne, %1, %c0_i32_0 : i32
    scf.if %2 {
      %c0_6 = arith.constant 0 : index
      %c0_7 = arith.constant 0 : index
      %7 = vector.load %arg3[%c0_6, %c0_7] : memref<16x128xf32, #tpu.memory_space<vmem>>, vector<16x128xf32>
      %8 = math.tanh %7 : vector<16x128xf32>
      %c0_8 = arith.constant 0 : index
      %c0_9 = arith.constant 0 : index
      %9 = vector.load %arg4[%c0_8, %c0_9] : memref<16x128xf32, #tpu.memory_space<vmem>>, vector<16x128xf32>
      %10 = arith.negf %9 : vector<16x128xf32>
      %11 = math.exp %10 : vector<16x128xf32>
      %cst_10 = arith.constant 1.000000e+00 : f32
      %12 = vector.broadcast %cst_10 : f32 to vector<16x128xf32>
      %13 = arith.addf %12, %11 : vector<16x128xf32>
      %14 = arith.divf %12, %13 : vector<16x128xf32>
      %15 = arith.mulf %8, %14 : vector<16x128xf32>
      %c0_11 = arith.constant 0 : index
      %c0_12 = arith.constant 0 : index
      %16 = vector.load %arg6[%c0_11, %c0_12] : memref<16x128xf32, #tpu.memory_space<vmem>>, vector<16x128xf32>
      tpu.vector_store %arg6[%c0_11, %c0_12], %15 {strides = array<i32>} : memref<16x128xf32, #tpu.memory_space<vmem>>, vector<16x128xf32>,
    } else {
    }
    %c0 = arith.constant 0 : index
    %c0_1 = arith.constant 0 : index
    %3 = vector.load %arg2[%c0, %c0_1] : memref<8x16xf32, #tpu.memory_space<vmem>>, vector<8x16xf32>
    %c0_2 = arith.constant 0 : index
    %c0_3 = arith.constant 0 : index
    %4 = vector.load %arg6[%c0_2, %c0_3] : memref<16x128xf32, #tpu.memory_space<vmem>>, vector<16x128xf32>
    %cst = arith.constant dense<0.000000e+00> : vector<8x128xf32>
    %5 = tpu.matmul %3, %4, %cst {dimension_numbers = #tpu.dot_dimension_numbers<[1], [0], [0], [1], [0, 0, 1, 1], [], []>} : vector<8x16xf32>, vector<16x128xf32>, vector<8x128xf32> -> vector<8x128xf32>
    %c0_4 = arith.constant 0 : index
    %c0_5 = arith.constant 0 : index
    %6 = vector.load %arg5[%c0_4, %c0_5] : memref<8x128xf32, #tpu.memory_space<vmem>>, vector<8x128xf32>
    tpu.vector_store %arg5[%c0_4, %c0_5], %5 {strides = array<i32>} : memref<8x128xf32, #tpu.memory_space<vmem>>, vector<8x128xf32>,
    return
  }
  func.func @transform_0(%arg0: i32, %arg1: i32) -> (i32, i32) {
    %c0_i32 = arith.constant 0 : i32
    %c0_i32_0 = arith.constant 0 : i32
    return %arg1, %c0_i32 : i32, i32
  }
  func.func @transform_1(%arg0: i32, %arg1: i32) -> (i32, i32) {
    %c0_i32 = arith.constant 0 : i32
    %c0_i32_0 = arith.constant 0 : i32
    return %c0_i32, %arg0 : i32, i32
  }
  func.func @transform_2(%arg0: i32, %arg1: i32) -> (i32, i32) {
    %c0_i32 = arith.constant 0 : i32
    %c0_i32_0 = arith.constant 0 : i32
    return %c0_i32, %arg0 : i32, i32
  }
  func.func @transform_3(%arg0: i32, %arg1: i32) -> (i32, i32) {
    %c0_i32 = arith.constant 0 : i32
    return %arg1, %arg0 : i32, i32
  }
}

</mosaic_0001>

<llo_original>
// kernel: tpu_custom_call.1
$region0: #{tpu_custom_call.1}
  #allocation0 [shape = 'u32[]', space=smem, size = 0x4, offset = 0x4, fixed_abs, tag = 'smem constant byte address 0x4 - core index']
  #allocation1 [shape = 'u32[144,128]{1,0:T(1,128)}', space=vmem, size = 0x12000, scoped, tag = 'internal scratch']
  #allocation2 [shape = 'f32[16,128]{1,0:T(8,128)}', space=vmem, size = 0x2000, scoped, tag = 'scratch operand']
  %s0 = inlined_call_operand.vmem [shape: f32[24,16], index: 0, kind: input, shape index: {}]
  %s1 = inlined_call_operand.vmem [shape: f32[16,256], index: 1, kind: input, shape index: {}]
  %s2 = inlined_call_operand.hbm [shape: f32[16,256], index: 2, kind: input, shape index: {}]
  %s3 = inlined_call_operand.hbm [shape: f32[24,256], index: 3, kind: output, shape index: {}]
  %s4 = sld [smem:[#allocation0]]
  $region91: #{tpu_custom_call.1} parent=0
    _
  %s6 = ssub.s32 1, %s4
  %s7 = scalar_select 0, %s6, %s4
  $region1: #{tpu_custom_call.1} parent=0
    #allocation3 [shape = 'u8[16384]{0}', space=vmem, size = 0x4000, scoped, tag = 'input window, operand 1']
    #allocation4 [shape = 'u8[16384]{0}', space=vmem, size = 0x4000, scoped, tag = 'input window, operand 2']
    #allocation5 [shape = 's32[2]{0}', space=sflag, size = 0x8, scoped, tag = 'scoped memory for tpu_custom_call.1']
    #allocation6 [shape = 's32[2]{0}', space=sflag, size = 0x8, scoped, tag = 'scoped memory for tpu_custom_call.1']
    #allocation7 [shape = 'u8[8192]{0}', space=vmem, size = 0x2000, scoped, tag = 'output window, operand 0']
    %8 = vsyncpa [#allocation5], 0
    %s9 = scalar_lea.sflag [#allocation5], 1
    %10 = vsyncpa %s9, 0
    %11 = vsyncpa [#allocation6], 0
    %s12 = scalar_lea.sflag [#allocation6], 1
    %13 = vsyncpa %s12, 0
    loop: start=0, step=1, limit=8
    $region2: #{tpu_custom_call.1} parent=1 // loop_pre_header
      _
    $region3: #{tpu_custom_call.1} parent=1 // loop_header
      %s15 = sphi 0, %s19
      %p16 = scmp.ge.s32.totalorder %s15, 8
      %s22 = sphi 0, %s34
      %s23 = sphi 0, %s30
      %s24 = sphi 0, %s22
      %s25 = sphi 0, %s23
      %s26 = sphi 0, %s24
      %s27 = sphi 0, %s25
      %s37 = sphi 0, %s39
      %s40 = sphi 0, %s37
      %s41 = sphi 0, %s40
      %s57 = sphi 0, %s41
      %s63 = sphi 0, %s65
      %s66 = sphi 0, %s63
      %s67 = sphi 0, %s66
      %s83 = sphi 0, %s67
      %s89 = sphi 0, %s91
      %s92 = sphi 0, %s89
      %s93 = sphi 0, %s92
      %s109 = sphi 0, %s93
      %s117 = sphi 0, %s119
      %s120 = sphi 0, %s117
      %s121 = sphi 0, %s120
      %s137 = sphi 0, %s121
    $region4: #{tpu_custom_call.1} parent=1 // loop_header_branch
      %18 = sbr.rel (%p16) target = $region8
    $region5: #{tpu_custom_call.1} parent=1 // loop_body
      %s20 = ssub.s32 %s15, 1
      %s21 = ssub.s32 %s15, 2
      %s28 = sadd.s32 1, %s23
      %p29 = scmp.ge.s32.totalorder %s28, 3
      %s30 = scalar_select %p29, 0, %s28
      %s31 = sadd.s32 1, %s22
      %s32 = scalar_select %p29, %s31, %s22
      %p33 = scmp.ge.s32.totalorder %s32, 2
      %s34 = scalar_select %p33, 0, %s32
      %s35 = ssub.s32 %s23, %s30
      %p36 = scmp.eq.s32.totalorder %s35, 0
      %s38 = sadd.s32 %s37, 1
      %s39 = scalar_select %p36, %s37, %s38
      %p42 = pneg %p36
      %p43 = scmp.eq.s32.totalorder %s15, 5
      %p44 = por %p42, %p43
      %p45 = scmp.ne.s32.totalorder %s37, %s40
      %p46 = scmp.eq.s32.totalorder %s15, 0
      %p47 = por %p45, %p46
      %p48 = scmp.ne.s32.totalorder %s37, %s40
      %p49 = scmp.eq.s32.totalorder %s20, 5
      %p50 = por %p48, %p49
      %p51 = scmp.ne.s32.totalorder %s40, %s41
      %p52 = scmp.eq.s32.totalorder %s20, 0
      %p53 = por %p51, %p52
      %p54 = scmp.ne.s32.totalorder %s40, %s41
      %p55 = scmp.eq.s32.totalorder %s21, 5
      %p56 = por %p54, %p55
      %p58 = scmp.ne.s32.totalorder %s41, %s57
      %p59 = scmp.eq.s32.totalorder %s21, 0
      %p60 = por %p58, %p59
      %s61 = ssub.s32 %s22, %s34
      %p62 = scmp.eq.s32.totalorder %s61, 0
      %s64 = sadd.s32 %s63, 1
      %s65 = scalar_select %p62, %s63, %s64
      %p68 = pneg %p62
      %p69 = scmp.eq.s32.totalorder %s15, 5
      %p70 = por %p68, %p69
      %p71 = scmp.ne.s32.totalorder %s63, %s66
      %p72 = scmp.eq.s32.totalorder %s15, 0
      %p73 = por %p71, %p72
      %p74 = scmp.ne.s32.totalorder %s63, %s66
      %p75 = scmp.eq.s32.totalorder %s20, 5
      %p76 = por %p74, %p75
      %p77 = scmp.ne.s32.totalorder %s66, %s67
      %p78 = scmp.eq.s32.totalorder %s20, 0
      %p79 = por %p77, %p78
      %p80 = scmp.ne.s32.totalorder %s66, %s67
      %p81 = scmp.eq.s32.totalorder %s21, 5
      %p82 = por %p80, %p81
      %p84 = scmp.ne.s32.totalorder %s67, %s83
      %p85 = scmp.eq.s32.totalorder %s21, 0
      %p86 = por %p84, %p85
      %s87 = ssub.s32 %s22, %s34
      %p88 = scmp.eq.s32.totalorder %s87, 0
      %s90 = sadd.s32 %s89, 1
      %s91 = scalar_select %p88, %s89, %s90
      %p94 = pneg %p88
      %p95 = scmp.eq.s32.totalorder %s15, 5
      %p96 = por %p94, %p95
      %p97 = scmp.ne.s32.totalorder %s89, %s92
      %p98 = scmp.eq.s32.totalorder %s15, 0
      %p99 = por %p97, %p98
      %p100 = scmp.ne.s32.totalorder %s89, %s92
      %p101 = scmp.eq.s32.totalorder %s20, 5
      %p102 = por %p100, %p101
      %p103 = scmp.ne.s32.totalorder %s92, %s93
      %p104 = scmp.eq.s32.totalorder %s20, 0
      %p105 = por %p103, %p104
      %p106 = scmp.ne.s32.totalorder %s92, %s93
      %p107 = scmp.eq.s32.totalorder %s21, 5
      %p108 = por %p106, %p107
      %p110 = scmp.ne.s32.totalorder %s93, %s109
      %p111 = scmp.eq.s32.totalorder %s21, 0
      %p112 = por %p110, %p111
      %s113 = ssub.s32 %s23, %s30
      %s114 = ssub.s32 %s22, %s34
      %s115 = sor.u32 %s113, %s114
      %p116 = scmp.eq.s32.totalorder %s115, 0
      %s118 = sadd.s32 %s117, 1
      %s119 = scalar_select %p116, %s117, %s118
      %p122 = pneg %p116
      %p123 = scmp.eq.s32.totalorder %s15, 5
      %p124 = por %p122, %p123
      %p125 = scmp.ne.s32.totalorder %s117, %s120
      %p126 = scmp.eq.s32.totalorder %s15, 0
      %p127 = por %p125, %p126
      %p128 = scmp.ne.s32.totalorder %s117, %s120
      %p129 = scmp.eq.s32.totalorder %s20, 5
      %p130 = por %p128, %p129
      %p131 = scmp.ne.s32.totalorder %s120, %s121
      %p132 = scmp.eq.s32.totalorder %s20, 0
      %p133 = por %p131, %p132
      %p134 = scmp.ne.s32.totalorder %s120, %s121
      %p135 = scmp.eq.s32.totalorder %s21, 5
      %p136 = por %p134, %p135
      %p138 = scmp.ne.s32.totalorder %s121, %s137
      %p139 = scmp.eq.s32.totalorder %s21, 0
      %p140 = por %p138, %p139
      %p141 = scmp.le.s32.totalorder 1, %s15
      %p142 = scmp.lt.s32.totalorder %s15, 7
      %p143 = pnand %p141, %p142
      %p144 = pneg %p143
      // Predicated region
      $region9: #{tpu_custom_call.1} parent=5 // pred_check
        _
      $region10: #{tpu_custom_call.1} parent=5 // pred_check_branch
        %146 = sbr.rel (%p143) target = $region12
      $region11: #{tpu_custom_call.1} parent=5 // pred_region
        %s147 = ssub.s32 %s15, 1
      $region12: #{tpu_custom_call.1} parent=5 // pred_fallthru
        _
      %p148 = scmp.lt.s32.totalorder %s15, 6
      // Predicated region
      $region13: #{tpu_custom_call.1} parent=5 // pred_check
        %p149 = pneg %p148
      $region14: #{tpu_custom_call.1} parent=5 // pred_check_branch
        %151 = sbr.rel (%p149) target = $region16
      $region15: #{tpu_custom_call.1} parent=5 // pred_region
        // Predicated region
        $region17: #{tpu_custom_call.1} parent=15 // pred_check
          %p152 = pneg %p47
        $region18: #{tpu_custom_call.1} parent=15 // pred_check_branch
          %154 = sbr.rel (%p152) target = $region20
        $region19: #{tpu_custom_call.1} parent=15 // pred_region
          %p155 = scmp.lt.s32.totalorder %s23, 2
          %s156 = scalar_select %p155, %s23, 2
          %s157 = smul.addr %s156, 8
          %s158 = scalar_lea.vmem %s0, %s157
        $region20: #{tpu_custom_call.1} parent=15 // pred_fallthru
          _
        // Predicated region
        $region21: #{tpu_custom_call.1} parent=15 // pred_check
          %p159 = pneg %p73
        $region22: #{tpu_custom_call.1} parent=15 // pred_check_branch
          %161 = sbr.rel (%p159) target = $region24
        $region23: #{tpu_custom_call.1} parent=15 // pred_region
          %s162 = sand.u32 %s63, 1
          %s163 = sand.u32 %s63, 1
          %s164 = smul.addr %s163, 16
          %s165 = scalar_lea.vmem [#allocation3], %s164
          %s166 = smul.addr %s22, 8
          %s167 = scalar_lea.vmem %s1, %s166
          // Predicated region
          $region25: #{tpu_custom_call.1} parent=23 // pred_check
            _
          $region26: #{tpu_custom_call.1} parent=23 // pred_check_branch
            %169 = sbr.rel (0) target = $region28
          $region27: #{tpu_custom_call.1} parent=23 // pred_region
            // Predicated region
            $region29: #{tpu_custom_call.1} parent=27 // pred_check
              _
            $region30: #{tpu_custom_call.1} parent=27 // pred_check_branch
              %171 = sbr.rel (0) target = $region32
            $region31: #{tpu_custom_call.1} parent=27 // pred_region
              // Predicated region
              $region44: #{tpu_custom_call.1} parent=31 // pred_check
                _
              $region45: #{tpu_custom_call.1} parent=31 // pred_check_branch
                %188 = sbr.rel (0) target = $region47
              $region46: #{tpu_custom_call.1} parent=31 // pred_region
                loop: start=0, step=1, limit=1
                $region48: #{tpu_custom_call.1} parent=46 // loop_pre_header
                  _
                $region49: #{tpu_custom_call.1} parent=46 // loop_header
                  %s190 = sphi 0, %s194
                  %p191 = scmp.ge.s32.totalorder %s190, 1
                  %s195 = sphi %s167, %s167
                  %s196 = sphi %s165, %s165
                $region50: #{tpu_custom_call.1} parent=46 // loop_header_branch
                  %193 = sbr.rel (%p191) target = $region54
                $region51: #{tpu_custom_call.1} parent=46 // loop_body
                  %v197 = vld [vmem:[%s195] sm:$0xff]
                  %198 = vst [vmem:[%s196] sm:$0xff] %v197
                  %v199 = vld [vmem:[%s195 + $0x10] sm:$0xff]
                  %200 = vst [vmem:[%s196 + $0x8] sm:$0xff] %v199
                $region52: #{tpu_custom_call.1} parent=46 // loop_footer
                  %s194 = sadd.s32 1, %s190
                $region53: #{tpu_custom_call.1} parent=46 // loop_footer_branch
                  %189 = sbr.rel target = $region49
                $region54: #{tpu_custom_call.1} parent=46 // loop_exit
                  _
              $region47: #{tpu_custom_call.1} parent=31 // pred_fallthru
                _
              // Predicated region
              $region55: #{tpu_custom_call.1} parent=31 // pred_check
                _
              $region56: #{tpu_custom_call.1} parent=31 // pred_check_branch
                %202 = sbr.rel target = $region58
              $region57: #{tpu_custom_call.1} parent=31 // pred_region
                _
              $region58: #{tpu_custom_call.1} parent=31 // pred_fallthru
                _
            $region32: #{tpu_custom_call.1} parent=27 // pred_fallthru
              _
            // Predicated region
            $region33: #{tpu_custom_call.1} parent=27 // pred_check
              _
            $region34: #{tpu_custom_call.1} parent=27 // pred_check_branch
              %173 = sbr.rel target = $region36
            $region35: #{tpu_custom_call.1} parent=27 // pred_region
              loop: start=0, step=1, limit=1
              $region37: #{tpu_custom_call.1} parent=35 // loop_pre_header
                _
              $region38: #{tpu_custom_call.1} parent=35 // loop_header
                %s176 = sphi 0, %s180
                %p177 = scmp.ge.s32.totalorder %s176, 1
                %s181 = sphi %s167, %s167
                %s182 = sphi %s165, %s165
              $region39: #{tpu_custom_call.1} parent=35 // loop_header_branch
                %179 = sbr.rel (%p177) target = $region43
              $region40: #{tpu_custom_call.1} parent=35 // loop_body
                %v183 = vld [vmem:[%s181] sm:$0xff]
                %184 = vst [vmem:[%s182] sm:$0xff] %v183
                %v185 = vld [vmem:[%s181 + $0x10] sm:$0xff]
                %186 = vst [vmem:[%s182 + $0x8] sm:$0xff] %v185
              $region41: #{tpu_custom_call.1} parent=35 // loop_footer
                %s180 = sadd.s32 1, %s176
              $region42: #{tpu_custom_call.1} parent=35 // loop_footer_branch
                %175 = sbr.rel target = $region38
              $region43: #{tpu_custom_call.1} parent=35 // loop_exit
                _
            $region36: #{tpu_custom_call.1} parent=27 // pred_fallthru
              _
          $region28: #{tpu_custom_call.1} parent=23 // pred_fallthru
            _
          %203 = vnop
        $region24: #{tpu_custom_call.1} parent=15 // pred_fallthru
          _
        // Predicated region
        $region59: #{tpu_custom_call.1} parent=15 // pred_check
          %p204 = pneg %p99
        $region60: #{tpu_custom_call.1} parent=15 // pred_check_branch
          %206 = sbr.rel (%p204) target = $region62
        $region61: #{tpu_custom_call.1} parent=15 // pred_region
          %s207 = sand.u32 %s89, 1
          %s208 = scalar_lea.sflag [#allocation5], %s207
          %s209 = sand.u32 %s89, 1
          %s210 = smul.addr %s209, 16
          %s211 = scalar_lea.vmem [#allocation4], %s210
          %s213 = ssub.s32 256, 256
          %214 = vsyncadd %s208, %s213
          %s215 = smul.addr %s22, 128
          %s216 = scalar_lea.hbm %s2, %s215
          %s217 = sshll.u32 %s211, 4
          %s218 = int_to_ptr.vmem [resolvable:$true] %s217
          %223 = dma.hbm_to_vmem [thread:$0]  %s216, 256, %s218, %s208, 256, 128, 8
        $region62: #{tpu_custom_call.1} parent=15 // pred_fallthru
          _
      $region16: #{tpu_custom_call.1} parent=5 // pred_fallthru
        _
      %p224 = scmp.le.s32.totalorder 1, %s15
      %p225 = scmp.lt.s32.totalorder %s15, 7
      %p226 = pnand %p224, %p225
      %p227 = pneg %p226
      // Predicated region
      $region63: #{tpu_custom_call.1} parent=5 // pred_check
        _
      $region64: #{tpu_custom_call.1} parent=5 // pred_check_branch
        %229 = sbr.rel (%p226) target = $region66
      $region65: #{tpu_custom_call.1} parent=5 // pred_region
        %s230 = ssub.s32 %s15, 1
        %s231 = sand.u32 %s66, 1
        %s232 = sand.u32 %s66, 1
        %s233 = smul.addr %s232, 16
        %s234 = scalar_lea.vmem [#allocation3], %s233
        // Predicated region
        $region67: #{tpu_custom_call.1} parent=65 // pred_check
          %p235 = pneg %p79
        $region68: #{tpu_custom_call.1} parent=65 // pred_check_branch
          %237 = sbr.rel (%p235) target = $region70
        $region69: #{tpu_custom_call.1} parent=65 // pred_region
          _
        $region70: #{tpu_custom_call.1} parent=65 // pred_fallthru
          _
        %s238 = sand.u32 %s92, 1
        %s239 = scalar_lea.sflag [#allocation5], %s238
        %s240 = sand.u32 %s92, 1
        %s241 = smul.addr %s240, 16
        %s242 = scalar_lea.vmem [#allocation4], %s241
        // Predicated region
        $region71: #{tpu_custom_call.1} parent=65 // pred_check
          %p243 = pneg %p105
        $region72: #{tpu_custom_call.1} parent=65 // pred_check_branch
          %245 = sbr.rel (%p243) target = $region74
        $region73: #{tpu_custom_call.1} parent=65 // pred_region
          %246 = dma.done %s239, 256
        $region74: #{tpu_custom_call.1} parent=65 // pred_fallthru
          _
        %p247 = scmp.lt.s32.totalorder %s25, 2
        %s248 = scalar_select %p247, %s25, 2
        %s249 = smul.addr %s248, 8
        %s250 = scalar_lea.vmem %s0, %s249
        %p251 = pneg %p53
        %p252 = pneg %p50
        %s253 = sand.u32 %s66, 1
        %s254 = sand.u32 %s66, 1
        %s255 = smul.addr %s254, 16
        %s256 = scalar_lea.vmem [#allocation3], %s255
        %p257 = pneg %p79
        %p258 = pneg %p76
        %s259 = sand.u32 %s92, 1
        %s260 = scalar_lea.sflag [#allocation5], %s259
        %s261 = sand.u32 %s92, 1
        %s262 = smul.addr %s261, 16
        %s263 = scalar_lea.vmem [#allocation4], %s262
        %p264 = pneg %p105
        %p265 = pneg %p102
        %p266 = pneg %p133
        %p267 = pneg %p130
        %s268 = sand.u32 %s120, 1
        %s269 = scalar_lea.sflag [#allocation6], %s268
        %s270 = sand.u32 %s120, 1
        %s271 = smul.addr %s270, 8
        %s272 = scalar_lea.vmem [#allocation7], %s271
        %p273 = scmp.lt.s32.totalorder %s25, 2
        %s274 = scalar_select %p273, %s25, 2
        %s275 = smul.addr %s274, 8
        %s276 = scalar_lea.vmem %s0, %s275
        %p277 = scmp.eq.s32.totalorder %s25, 0
        // Predicated region
        $region75: #{tpu_custom_call.1} parent=65 // pred_check
          %p278 = pneg %p277
        $region76: #{tpu_custom_call.1} parent=65 // pred_check_branch
          %280 = sbr.rel (%p278) target = $region78
        $region77: #{tpu_custom_call.1} parent=65 // pred_region
          %v281 = vld [vmem:[%s234] sm:$0xff]
          %v282 = vld [vmem:[%s234 + $0x8] sm:$0xff]
          %v283 = vtanh.pop %v281
          %v284 = vtanh.pop %v282
          %v285 = vld [vmem:[%s242] sm:$0xff]
          %v286 = vld [vmem:[%s242 + $0x8] sm:$0xff]
          %v287 = vxor.u32 %v285, 2147483648
          %v288 = vxor.u32 %v286, 2147483648
          %v289 = vmul.f32 %v287, 1.442695
          %v290 = vpow.pop %v289
          %v291 = vmul.f32 %v288, 1.442695
          %v292 = vpow.pop %v291
          %v293 = vadd.f32 %v290, 1.0
          %v294 = vadd.f32 %v292, 1.0
          %v295 = vrcp.pop %v293
          %v296 = vmul.f32 1.0, %v295
          %v297 = vrcp.pop %v294
          %v298 = vmul.f32 1.0, %v297
          %v299 = vmul.f32 %v283, %v296
          %v300 = vmul.f32 %v284, %v298
          %301 = vst [vmem:[#allocation2] sm:$0xff] %v299
          %302 = vst [vmem:[#allocation2 + $0x8] sm:$0xff] %v300
        $region78: #{tpu_custom_call.1} parent=65 // pred_fallthru
          _
        %v303 = vld [vmem:[%s276] sm:$0xff]
        %v304 = vld [vmem:[#allocation2] sm:$0xff]
        %v305 = vld [vmem:[#allocation2 + $0x8] sm:$0xff]
        %vm306 = vcmask 130048
        %v308 = vsel %vm306, %v303, 0
        %310 = vmatprep.subr.mxu0 0.0
        %311 = vmatpush1.msra.mxu0 %v304
        %312 = vmatprep.subr.mxu0 0.0
        %313 = vmatpush1.msra.mxu0 %v305
        %314 = vmatprep.subr.mxu0 0.0
        %315 = vmatpush1.msra.mxu0 0.0
        %316 = vmatprep.subr.mxu0 0.0
        %317 = vmatpush1.msra.mxu0 0.0
        %318 = vmatprep.subr.mxu0 0.0
        %319 = vmatpush1.msra.mxu0 0.0
        %320 = vmatprep.subr.mxu0 0.0
        %321 = vmatpush1.msra.mxu0 0.0
        %322 = vmatprep.subr.mxu0 0.0
        %323 = vmatpush1.msra.mxu0 0.0
        %324 = vmatprep.subr.mxu0 0.0
        %325 = vmatpush1.msra.mxu0 0.0
        %326 = vmatprep.subr.mxu0 0.0
        %327 = vmatpush1.msra.mxu0 0.0
        %328 = vmatprep.subr.mxu0 0.0
        %329 = vmatpush1.msra.mxu0 0.0
        %330 = vmatprep.subr.mxu0 0.0
        %331 = vmatpush1.msra.mxu0 0.0
        %332 = vmatprep.subr.mxu0 0.0
        %333 = vmatpush1.msra.mxu0 0.0
        %334 = vmatprep.subr.mxu0 0.0
        %335 = vmatpush1.msra.mxu0 0.0
        %336 = vmatprep.subr.mxu0 0.0
        %337 = vmatpush1.msra.mxu0 0.0
        %338 = vmatprep.subr.mxu0 0.0
        %339 = vmatpush1.msra.mxu0 0.0
        %340 = vmatprep.subr.mxu0 0.0
        %341 = vmatpush1.msra.mxu0 0.0
        %342 = vmatprep.subr.mxu0 0.0
        %343 = vmatpush1.msra.mxu0 0.0
        %344 = vmatprep.subr.mxu0 0.0
        %345 = vmatpush1.msra.mxu0 0.0
        %346 = vmatprep.subr.mxu0 0.0
        %347 = vmatpush1.msra.mxu0 0.0
        %348 = vmatprep.subr.mxu0 0.0
        %349 = vmatpush1.msra.mxu0 0.0
        %350 = vmatprep.subr.mxu0 0.0
        %351 = vmatpush1.msra.mxu0 0.0
        %352 = vmatprep.subr.mxu0 0.0
        %353 = vmatpush1.msra.mxu0 0.0
        %354 = vmatprep.subr.mxu0 0.0
        %355 = vmatpush1.msra.mxu0 0.0
        %356 = vmatprep.subr.mxu0 0.0
        %357 = vmatpush1.msra.mxu0 0.0
        %358 = vmatprep.subr.mxu0 0.0
        %359 = vmatpush1.msra.mxu0 0.0
        %360 = vmatprep.subr.mxu0 0.0
        %361 = vmatpush1.msra.mxu0 0.0
        %362 = vmatprep.subr.mxu0 0.0
        %363 = vmatpush1.msra.mxu0 0.0
        %364 = vmatprep.subr.mxu0 0.0
        %365 = vmatpush1.msra.mxu0 0.0
        %366 = vmatprep.subr.mxu0 0.0
        %367 = vmatpush1.msra.mxu0 0.0
        %368 = vmatprep.subr.mxu0 0.0
        %369 = vmatpush1.msra.mxu0 0.0
        %370 = vmatprep.subr.mxu0 0.0
        %371 = vmatpush1.msra.mxu0 0.0
        %372 = vmatprep.subr.mxu0 0.0
        %373 = vmatpush1.msra.mxu0 0.0
        %374 = vmatprep.mubr.f32.mxu0 0.0
        %375 = vmatmul.mubr.f32.gmra.mrb[0].mxu0 %v308
        %v376 = vpop.f32.mrb[0].mxu0
        %v377 = vadd.f32 0.0, %v376
        %v378 = vpop.f32.mrb[0].mxu0
        %379 = vdwg.mxu0
        %380 = vst [vmem:[%s272] sm:$0xff] %v377
        %s381 = sand.u32 %s120, 1
        %s382 = scalar_lea.sflag [#allocation6], %s381
        %s383 = sand.u32 %s120, 1
        %s384 = smul.addr %s383, 8
        %s385 = scalar_lea.vmem [#allocation7], %s384
        // Predicated region
        $region79: #{tpu_custom_call.1} parent=65 // pred_check
          %p386 = pneg %p130
        $region80: #{tpu_custom_call.1} parent=65 // pred_check_branch
          %388 = sbr.rel (%p386) target = $region82
        $region81: #{tpu_custom_call.1} parent=65 // pred_region
          %s390 = ssub.s32 128, 128
          %391 = vsyncadd %s382, %s390
          %s392 = smul.addr %s25, 2
          %s393 = sadd.s32 %s24, %s392
          %s394 = smul.addr %s393, 128
          %s395 = scalar_lea.hbm %s3, %s394
          %s397 = sshll.u32 %s385, 4
          %s398 = int_to_ptr.vmem [resolvable:$true] %s397
          %400 = dma.vmem_to_hbm [thread:$0]  %s398, 128, %s395, %s382
        $region82: #{tpu_custom_call.1} parent=65 // pred_fallthru
          _
      $region66: #{tpu_custom_call.1} parent=5 // pred_fallthru
        _
      %p401 = scmp.le.s32.totalorder 2, %s15
      // Predicated region
      $region83: #{tpu_custom_call.1} parent=5 // pred_check
        %p402 = pneg %p401
      $region84: #{tpu_custom_call.1} parent=5 // pred_check_branch
        %404 = sbr.rel (%p402) target = $region86
      $region85: #{tpu_custom_call.1} parent=5 // pred_region
        %s405 = ssub.s32 %s15, 2
        // Predicated region
        $region87: #{tpu_custom_call.1} parent=85 // pred_check
          %p406 = pneg %p136
        $region88: #{tpu_custom_call.1} parent=85 // pred_check_branch
          %408 = sbr.rel (%p406) target = $region90
        $region89: #{tpu_custom_call.1} parent=85 // pred_region
          %s409 = sand.u32 %s121, 1
          %s410 = scalar_lea.sflag [#allocation6], %s409
          %s411 = sand.u32 %s121, 1
          %s412 = smul.addr %s411, 8
          %s413 = scalar_lea.vmem [#allocation7], %s412
          %414 = dma.done %s410, 128
        $region90: #{tpu_custom_call.1} parent=85 // pred_fallthru
          _
      $region86: #{tpu_custom_call.1} parent=5 // pred_fallthru
        _
    $region6: #{tpu_custom_call.1} parent=1 // loop_footer
      %s19 = sadd.s32 1, %s15
    $region7: #{tpu_custom_call.1} parent=1 // loop_footer_branch
      %14 = sbr.rel target = $region3
    $region8: #{tpu_custom_call.1} parent=1 // loop_exit
      _
    %415 = vsyncpa [#allocation5], 1
    %s416 = scalar_lea.sflag [#allocation5], 1
    %417 = vsyncpa %s416, 1
    %418 = vsyncpa [#allocation6], 1
    %s419 = scalar_lea.sflag [#allocation6], 1
    %420 = vsyncpa %s419, 1

</llo_original>
